<compile_context>
chip_gen: v7x
topology: tpu7x:2x2x1
jax: 0.10.0
libtpu: 0.0.40
codegen_flags: <defaults>
</compile_context>

<pallas_src>
import functools
import math

import jax
import jax.numpy as jnp
from jax.experimental import pallas as pl
from jax.experimental.pallas import tpu as pltpu


def _build_pe(d_model: int, max_len: int, dtype=jnp.float32) -> jnp.ndarray:
    """Reference positional-encoding buffer, identical to the PyTorch __init__."""
    position = jnp.arange(0, max_len, dtype=jnp.float32)[:, None]          # (max_len, 1)
    div_term = jnp.exp(
        jnp.arange(0, d_model, 2, dtype=jnp.float32) * (-math.log(10000.0) / d_model)
    )                                                                       # (d_model//2,)
    ang = position * div_term
    pe = jnp.zeros((max_len, d_model), dtype=jnp.float32)
    pe = pe.at[:, 0::2].set(jnp.sin(ang))
    pe = pe.at[:, 1::2].set(jnp.cos(ang))
    # unsqueeze(0).transpose(0,1) -> (max_len, 1, d_model)
    return pe[:, None, :].astype(dtype)


def _pe_add_kernel(x_ref, o_ref, *, d_model: int):
    """x_ref/o_ref: one (tile_s, tile_c) block of the lane-dense (S, B*D) view."""
    rows, cols = x_ref.shape
    si = pl.program_id(0)      # sequence-tile index
    ci = pl.program_id(1)      # lane-tile index

    # Per-column quantities on a (1, cols) row vector; the expensive exp() is
    # O(cols), broadcast over sublanes afterwards.
    col = ci * cols + jax.lax.broadcasted_iota(jnp.int32, (1, cols), 1)
    if d_model & (d_model - 1) == 0:
        feat = col & (d_model - 1)            # feature index within one d_model slab
    else:
        feat = col % d_model
    parity = feat & 1
    pair = (feat - parity).astype(jnp.float32)                   # 2 * (feat // 2)
    inv_freq = jnp.exp(pair * (-math.log(10000.0) / d_model))    # (1, cols)
    # Even features use sin, odd use cos == sin(. + pi/2): one transcendental/elem.
    phase = jnp.where(parity == 0, 0.0, 0.5 * math.pi)           # (1, cols)

    # Global sequence position per row, broadcast across lanes.
    pos = (si * rows + jax.lax.broadcasted_iota(jnp.int32, (rows, 1), 0)
           ).astype(jnp.float32)                                 # (rows, 1)

    pe = jnp.sin(pos * inv_freq + phase)                         # (rows, cols) f32
    x = x_ref[...]
    if x.dtype == jnp.float32:
        o_ref[...] = x + pe
    else:
        # bf16/f16 inputs: add in f32, cast back to the output dtype.
        o_ref[...] = (x.astype(jnp.float32) + pe).astype(o_ref.dtype)


def positional_encoding_forward(x: jnp.ndarray, *, tile_s: int | None = None,
                                tile_c: int | None = None) -> jnp.ndarray:
    """x: (S, B, D) seq-first.  Returns x + pe[:S] (pe broadcast over batch)."""
    S, B, D = x.shape
    cols = B * D
    itemsize = jnp.dtype(x.dtype).itemsize
    sub = 8 * max(1, 4 // itemsize)        # sublane multiple: f32->8, bf16->16, int8->32
    target = 2 * 1024 * 1024               # ~2 MiB tile; double-buffered in+out ~= 8 MiB VMEM

    # Lane-axis tile: whole width unless even `sub` rows of it would blow the budget.
    if tile_c is None:
        if cols <= 128 or cols * itemsize * sub <= target:
            tile_c = cols
        else:
            tile_c = max(128, ((target // (sub * itemsize)) // 128) * 128)
    if tile_c >= cols:
        tile_c = cols
    else:
        tile_c = ((tile_c + 127) // 128) * 128       # lane blocks must be %128
        if tile_c >= cols:
            tile_c = cols

    # Sequence-axis tile: ~target bytes, multiple of `sub` (or the full S).
    if tile_s is None:
        rows = max(1, target // max(1, tile_c * itemsize))
        tile_s = max(sub, (rows // sub) * sub)
    if tile_s >= S:
        tile_s = S
    else:
        tile_s = ((tile_s + sub - 1) // sub) * sub   # sublane blocks must be %sub
        if tile_s >= S:
            tile_s = S

    # Lane-dense view: (S, B, D) -> (S, B*D) is a free reshape of a contiguous array.
    x2 = x.reshape(S, cols)
    grid = (pl.cdiv(S, tile_s), pl.cdiv(cols, tile_c))
    kernel = functools.partial(_pe_add_kernel, d_model=D)

    out2 = pl.pallas_call(
        kernel,
        out_shape=jax.ShapeDtypeStruct((S, cols), x.dtype),
        grid_spec=pltpu.PrefetchScalarGridSpec(
            num_scalar_prefetch=0,
            grid=grid,
            in_specs=[pl.BlockSpec((tile_s, tile_c), lambda i, j: (i, j))],
            out_specs=pl.BlockSpec((tile_s, tile_c), lambda i, j: (i, j)),
        ),
        compiler_params=pltpu.CompilerParams(
            # Both axes are independent -> let v7x shard across its 2 TensorCores.
            dimension_semantics=("parallel", "parallel"),
        ),
        # Advisory: ~1 sin per element, read+write each element once.
        cost_estimate=pl.CostEstimate(
            flops=2 * S * cols,
            transcendentals=S * cols,
            bytes_accessed=2 * S * cols * itemsize,
        ),
        # In-place-friendly update; reuses x's HBM buffer when the caller donates x
        # (XLA inserts a copy otherwise, so correctness never depends on it).
        input_output_aliases={0: 0},
    )(x2)
    return out2.reshape(S, B, D)


if __name__ == "__main__":
    d_model = 32
    max_len = 64          # small deterministic buffer for the reference (module default 5000)
    seq_len = 32
    batch = 2

    key = jax.random.PRNGKey(0)
    x = jax.random.normal(key, (seq_len, batch, d_model), dtype=jnp.float32)

    pe = _build_pe(d_model, max_len)          # same buffer the PyTorch module registers
    ref = x + pe[:seq_len]

    # 1) Auto tiling (whole array in one block at this tiny size).
    out = jax.block_until_ready(positional_encoding_forward(x))
    assert out.shape == (seq_len, batch, d_model)
    assert jnp.allclose(out, ref, atol=1e-4), "mismatch vs reference (auto tiles)"

    # 2) Forced multi-step grid over the sequence axis (exercises the pipelined path).
    out_t = jax.block_until_ready(positional_encoding_forward(x, tile_s=8))
    assert jnp.allclose(out_t, ref, atol=1e-4), "mismatch vs reference (tile_s=8)"

    # 3) Ragged last tile: S not divisible by tile_s (out-of-bounds rows masked on store).
    x_r = x[:28]
    out_r = jax.block_until_ready(positional_encoding_forward(x_r, tile_s=8))
    assert jnp.allclose(out_r, ref[:28], atol=1e-4), "mismatch vs reference (ragged)"

    print("KERNEL_OK")
</pallas_src>

<mosaic_0001>
module attributes {stable_mosaic.version = 11 : i64} {
  func.func @_pe_add_kernel(%arg0: i32, %arg1: i32, %arg2: memref<32x64xf32, #tpu.memory_space<vmem>>, %arg3: memref<32x64xf32, #tpu.memory_space<vmem>>) attributes {dimension_semantics = [#tpu.dimension_semantics<parallel>, #tpu.dimension_semantics<parallel>], iteration_bounds = array<i64: 1, 1>, scalar_prefetch = 0 : i64, scratch_operands = 0 : i64, tpu.core_type = #tpu.core_type<tc>, window_params = [{transform_indices = @transform_0, window_bounds = array<i64: 32, 64>}, {transform_indices = @transform_1, window_bounds = array<i64: 32, 64>}]} {
    %c64_i32 = arith.constant 64 : i32
    %0 = arith.muli %arg1, %c64_i32 : i32
    %1 = tpu.iota {dimensions = array<i32: 1>} : vector<1x64xi32>
    %2 = vector.broadcast %0 : i32 to vector<1x64xi32>
    %3 = arith.addi %2, %1 : vector<1x64xi32>
    %c31_i32 = arith.constant 31 : i32
    %4 = vector.broadcast %c31_i32 : i32 to vector<1x64xi32>
    %5 = arith.andi %3, %4 : vector<1x64xi32>
    %c1_i32 = arith.constant 1 : i32
    %6 = vector.broadcast %c1_i32 : i32 to vector<1x64xi32>
    %7 = arith.andi %5, %6 : vector<1x64xi32>
    %8 = arith.subi %5, %7 : vector<1x64xi32>
    %9 = arith.sitofp %8 : vector<1x64xi32> to vector<1x64xf32>
    %cst = arith.constant -0.287823141 : f32
    %10 = vector.broadcast %cst : f32 to vector<1x64xf32>
    %11 = arith.mulf %9, %10 : vector<1x64xf32>
    %12 = math.exp %11 : vector<1x64xf32>
    %c0_i32 = arith.constant 0 : i32
    %13 = vector.broadcast %c0_i32 : i32 to vector<1x64xi32>
    %14 = arith.cmpi eq, %7, %13 : vector<1x64xi32>
    %cst_0 = arith.constant 0.000000e+00 : f32
    %cst_1 = arith.constant 1.57079637 : f32
    %15 = vector.broadcast %cst_0 : f32 to vector<1x64xf32>
    %16 = vector.broadcast %cst_1 : f32 to vector<1x64xf32>
    %17 = arith.select %14, %15, %16 : vector<1x64xi1>, vector<1x64xf32>
    %c32_i32 = arith.constant 32 : i32
    %18 = arith.muli %arg0, %c32_i32 : i32
    %19 = tpu.iota {dimensions = array<i32: 0>} : vector<32x1xi32>
    %20 = vector.broadcast %18 : i32 to vector<32x1xi32>
    %21 = arith.addi %20, %19 : vector<32x1xi32>
    %22 = arith.sitofp %21 : vector<32x1xi32> to vector<32x1xf32>
    %23 = vector.broadcast %22 : vector<32x1xf32> to vector<32x64xf32>
    %24 = vector.broadcast %12 : vector<1x64xf32> to vector<32x64xf32>
    %25 = arith.mulf %23, %24 : vector<32x64xf32>
    %26 = vector.broadcast %17 : vector<1x64xf32> to vector<32x64xf32>
    %27 = arith.addf %25, %26 : vector<32x64xf32>
    %28 = math.sin %27 : vector<32x64xf32>
    %c0 = arith.constant 0 : index
    %c0_2 = arith.constant 0 : index
    %29 = vector.load %arg2[%c0, %c0_2] : memref<32x64xf32, #tpu.memory_space<vmem>>, vector<32x64xf32>
    %30 = arith.addf %29, %28 : vector<32x64xf32>
    %c0_3 = arith.constant 0 : index
    %c0_4 = arith.constant 0 : index
    %31 = vector.load %arg3[%c0_3, %c0_4] : memref<32x64xf32, #tpu.memory_space<vmem>>, vector<32x64xf32>
    tpu.vector_store %arg3[%c0_3, %c0_4], %30 {strides = array<i32>} : memref<32x64xf32, #tpu.memory_space<vmem>>, vector<32x64xf32>,
    return
  }
  func.func @transform_0(%arg0: i32, %arg1: i32) -> (i32, i32) {
    %c0_i32 = arith.constant 0 : i32
    return %arg0, %arg1 : i32, i32
  }
  func.func @transform_1(%arg0: i32, %arg1: i32) -> (i32, i32) {
    %c0_i32 = arith.constant 0 : i32
    return %arg0, %arg1 : i32, i32
  }
}

</mosaic_0001>

<llo_original>
// kernel: tpu_custom_call.1
$region0: #{tpu_custom_call.1}
  #allocation0 [shape = 'u32[]', space=smem, size = 0x4, offset = 0x4, fixed_abs, tag = 'smem constant byte address 0x4 - core index']
  #allocation1 [shape = 'u32[144,128]{1,0:T(1,128)}', space=vmem, size = 0x12000, scoped, tag = 'internal scratch']
  %s0 = inlined_call_operand.hbm [shape: f32[32,64], index: 0, kind: input, shape index: {}, may-alias: {0,1}]
  %s1 = inlined_call_operand.hbm [shape: f32[32,64], index: 1, kind: output, shape index: {}, may-alias: {0,1}]
  %s2 = sld [smem:[#allocation0]]
  $region18: #{tpu_custom_call.1} parent=0
    _
  %s4 = ssub.s32 1, %s2
  %s5 = scalar_select 0, %s4, %s2
  $region1: #{tpu_custom_call.1} parent=0
    #allocation2 [shape = 'u8[16384]{0}', space=vmem, size = 0x4000, scoped, tag = 'input window, operand 0, single buffered']
    #allocation3 [shape = 's32[1]{0}', space=sflag, size = 0x4, scoped, tag = 'scoped memory for tpu_custom_call.1']
    #allocation4 [shape = 's32[1]{0}', space=sflag, size = 0x4, scoped, tag = 'scoped memory for tpu_custom_call.1']
    #allocation5 [shape = 'u8[16384]{0}', space=vmem, size = 0x4000, scoped, tag = 'output window, operand 0, single buffered']
    %6 = vsyncpa [#allocation3], 0
    %7 = vsyncpa [#allocation4], 0
    // Predicated region
    $region2: #{tpu_custom_call.1} parent=1 // pred_check
      _
    $region3: #{tpu_custom_call.1} parent=1 // pred_check_branch
      %9 = sbr.rel (0) target = $region5
    $region4: #{tpu_custom_call.1} parent=1 // pred_region
      %s11 = ssub.s32 512, 512
      %12 = vsyncadd [#allocation3], %s11
      %s13 = sshll.u32 [#allocation2], 4
      %s14 = int_to_ptr.vmem [resolvable:$true] %s13
      %19 = dma.hbm_to_vmem [thread:$0]  %s0, 512, %s14, [#allocation3], 128, 128, 8
    $region5: #{tpu_custom_call.1} parent=1 // pred_fallthru
      _
    // Predicated region
    $region6: #{tpu_custom_call.1} parent=1 // pred_check
      _
    $region7: #{tpu_custom_call.1} parent=1 // pred_check_branch
      %21 = sbr.rel (0) target = $region9
    $region8: #{tpu_custom_call.1} parent=1 // pred_region
      %22 = dma.done [#allocation3], 512
    $region9: #{tpu_custom_call.1} parent=1 // pred_fallthru
      _
    %s23 = smul.u32 0, 64
    %v24 = vlaneseq
    %v25 = vand.u32 %v24, 127
    %v26 = vstv %s23
    %v27 = vadd.s32 %v26, %v25
    %v28 = vand.u32 %v27, 31
    %v29 = vand.u32 %v28, 1
    %v30 = vsub.s32 %v28, %v29
    %v31 = vcvt.s32.f32 %v30
    %v32 = vmul.f32 %v31, -0.28782314
    %v33 = vmul.f32 %v32, 1.442695
    %v34 = vpow.pop %v33
    %vm35 = vcmp.eq.s32.totalorder %v29, 0
    %v36 = vsel %vm35, 0.0, 1.5707964
    %s37 = smul.u32 0, 32
    %v38 = vlaneseq
    %v39 = vshrl.u32 %v38, 7
    %v40 = vadd.s32 %v39, 8
    %v41 = vadd.s32 %v39, 16
    %v42 = vadd.s32 %v39, 24
    %v43 = vstv %s37
    %v44 = vadd.s32 %v43, %v39
    %v45 = vadd.s32 %v43, %v40
    %v46 = vadd.s32 %v43, %v41
    %v47 = vadd.s32 %v43, %v42
    %v48 = vcvt.s32.f32 %v44
    %v49 = vcvt.s32.f32 %v45
    %v50 = vcvt.s32.f32 %v46
    %v51 = vcvt.s32.f32 %v47
    %v52 = vmul.f32 %v48, %v34
    %v53 = vmul.f32 %v49, %v34
    %v54 = vmul.f32 %v50, %v34
    %v55 = vmul.f32 %v51, %v34
    %v56 = vadd.f32 %v52, %v36
    %v57 = vadd.f32 %v53, %v36
    %v58 = vadd.f32 %v54, %v36
    %v59 = vadd.f32 %v55, %v36
    %v60 = vand.u32 2147483647, %v56
    %vm61 = vcmp.le.f32.partialorder %v60, 0.7853982
    %vm62 = vcmp.lt.s32.totalorder %v56, 0
    %v63 = vand.u32 %v56, 2139095040
    %v64 = vshrl.u32 %v63, 23
    %v65 = vsub.s32 %v64, 127
    %v66 = vand.u32 2147483647, %v56
    %v67 = vand.u32 %v66, 8388607
    %v68 = vor.u32 %v67, 8388608
    %v69 = vsub.s32 0, %v68
    %v70 = vadd.s32 %v65, 1
    %vm71 = vcmp.gt.s32.totalorder %v70, 0
    %v72 = vsel %vm71, %v70, 0
    %v73 = vshrl.u32 %v72, 5
    %v74 = vand.u32 %v72, 31
    %v75 = vsub.s32 32, %v74
    %v76 = vshrl.u32 683565275, %v75
    %v77 = vshll.u32 683565275, %v74
    %v78 = vshrl.u32 2475754826, %v75
    %v79 = vor.u32 %v77, %v78
    %v80 = vshll.u32 2475754826, %v74
    %v81 = vshrl.u32 2131351028, %v75
    %v82 = vor.u32 %v80, %v81
    %v83 = vshll.u32 2131351028, %v74
    %v84 = vshrl.u32 2102212464, %v75
    %v85 = vor.u32 %v83, %v84
    %v86 = vshll.u32 2102212464, %v74
    %v87 = vshrl.u32 920167782, %v75
    %v88 = vor.u32 %v86, %v87
    %v89 = vshll.u32 920167782, %v74
    %v90 = vshrl.u32 1326507024, %v75
    %v91 = vor.u32 %v89, %v90
    %vm92 = vcmp.lt.s32.totalorder %v73, 1
    %vm93 = vcmp.lt.s32.totalorder %v73, 2
    %vm94 = vcmp.lt.s32.totalorder %v73, 3
    %vm95 = vcmp.lt.s32.totalorder %v73, 4
    %v96 = vsel %vm92, %v76, %v79
    %v97 = vsel %vm95, %v85, 2102212464
    %v98 = vsel %vm94, %v82, %v97
    %v99 = vsel %vm93, %v96, %v98
    %v100 = vsel %vm92, %v79, %v82
    %v101 = vsel %vm95, %v88, 920167782
    %v102 = vsel %vm94, %v85, %v101
    %v103 = vsel %vm93, %v100, %v102
    %v104 = vsel %vm92, %v82, %v85
    %v105 = vsel %vm95, %v91, 1326507024
    %v106 = vsel %vm94, %v88, %v105
    %v107 = vsel %vm93, %v104, %v106
    %v108 = vshll.u32 %v68, 8
    %v109 = vmul.u32.u64.compose %v108, %v107
    %v110 = vextract.low.u32 %v109
    %v111 = vextract.high.u32 %v109
    %v112 = vmul.u32.u64.compose %v108, %v103
    %v113 = vextract.low.u32 %v112
    %v114 = vextract.high.u32 %v112
    %v115 = vmul.u32 %v108, %v99
    %v116 = vadd.s32 %v111, %v113
    %vm117 = vc.u32 %v111, %v113
    %v118 = vadd.s32 %v114, 1
    %v119 = vsel %vm117, %v118, %v114
    %v120 = vadd.s32 %v115, %v119
    %v121 = vadd.s32 %v120, 536870912
    %v122 = vshrl.u32 %v121, 30
    %v123 = vshll.u32 %v122, 30
    %v124 = vsub.s32 %v120, %v123
    %vm125 = vcmp.lt.s32.totalorder %v124, 0
    %v126 = vsub.s32 0, %v124
    %v127 = vsel %vm125, %v126, %v124
    %v128 = vclz %v127
    %v129 = vsub.s32 %v128, 2
    %vm130 = vcmp.gt.s32.totalorder 0, %v129
    %v131 = vsel %vm130, 0, %v129
    %v132 = vsub.s32 32, %v131
    %v133 = vshll.u32 %v124, %v131
    %v134 = vshrl.u32 %v116, %v132
    %v135 = vor.u32 %v133, %v134
    %v136 = vsub.s32 4294967266, %v131
    %v137 = vadd.s32 %v136, 127
    %v138 = vshll.u32 %v137, 23
    %v139 = vor.u32 4788187, %v138
    %v140 = vand.u32 2147483647, %v139
    %v142 = vcvt.s32.f32 %v135
    %v143 = vmul.f32 %v142, %v140
    %v144 = vxor.u32 %v143, 2147483648
    %v145 = vsel %vm62, %v144, %v143
    %v146 = vsub.s32 4, %v122
    %v147 = vsel %vm62, %v146, %v122
    %v148 = vsel %vm61, %v56, %v145
    %v149 = vsel %vm61, 0, %v147
    %v150 = vcosq.f32.pop %v148
    %v151 = vsinq.f32.pop %v148
    %vm152 = vweird.f32 %v56
    %v153 = vadd.s32 %v149, 3
    %v154 = vand.u32 %v153, 3
    %vm155 = vcmp.lt.s32.totalorder %v154, 2
    %vm156 = vcmp.eq.s32.totalorder %v154, 0
    %v157 = vxor.u32 %v151, 2147483648
    %v158 = vsel %vm156, %v150, %v157
    %vm159 = vcmp.eq.s32.totalorder %v154, 2
    %v160 = vxor.u32 %v150, 2147483648
    %v161 = vsel %vm159, %v160, %v151
    %v162 = vsel %vm155, %v158, %v161
    %v163 = vsel %vm152, nan, %v162
    %v164 = vand.u32 2147483647, %v57
    %vm165 = vcmp.le.f32.partialorder %v164, 0.7853982
    %vm166 = vcmp.lt.s32.totalorder %v57, 0
    %v167 = vand.u32 %v57, 2139095040
    %v168 = vshrl.u32 %v167, 23
    %v169 = vsub.s32 %v168, 127
    %v170 = vand.u32 2147483647, %v57
    %v171 = vand.u32 %v170, 8388607
    %v172 = vor.u32 %v171, 8388608
    %v173 = vsub.s32 0, %v172
    %v174 = vadd.s32 %v169, 1
    %vm175 = vcmp.gt.s32.totalorder %v174, 0
    %v176 = vsel %vm175, %v174, 0
    %v177 = vshrl.u32 %v176, 5
    %v178 = vand.u32 %v176, 31
    %v179 = vsub.s32 32, %v178
    %v180 = vshrl.u32 683565275, %v179
    %v181 = vshll.u32 683565275, %v178
    %v182 = vshrl.u32 2475754826, %v179
    %v183 = vor.u32 %v181, %v182
    %v184 = vshll.u32 2475754826, %v178
    %v185 = vshrl.u32 2131351028, %v179
    %v186 = vor.u32 %v184, %v185
    %v187 = vshll.u32 2131351028, %v178
    %v188 = vshrl.u32 2102212464, %v179
    %v189 = vor.u32 %v187, %v188
    %v190 = vshll.u32 2102212464, %v178
    %v191 = vshrl.u32 920167782, %v179
    %v192 = vor.u32 %v190, %v191
    %v193 = vshll.u32 920167782, %v178
    %v194 = vshrl.u32 1326507024, %v179
    %v195 = vor.u32 %v193, %v194
    %vm196 = vcmp.lt.s32.totalorder %v177, 1
    %vm197 = vcmp.lt.s32.totalorder %v177, 2
    %vm198 = vcmp.lt.s32.totalorder %v177, 3
    %vm199 = vcmp.lt.s32.totalorder %v177, 4
    %v200 = vsel %vm196, %v180, %v183
    %v201 = vsel %vm199, %v189, 2102212464
    %v202 = vsel %vm198, %v186, %v201
    %v203 = vsel %vm197, %v200, %v202
    %v204 = vsel %vm196, %v183, %v186
    %v205 = vsel %vm199, %v192, 920167782
    %v206 = vsel %vm198, %v189, %v205
    %v207 = vsel %vm197, %v204, %v206
    %v208 = vsel %vm196, %v186, %v189
    %v209 = vsel %vm199, %v195, 1326507024
    %v210 = vsel %vm198, %v192, %v209
    %v211 = vsel %vm197, %v208, %v210
    %v212 = vshll.u32 %v172, 8
    %v213 = vmul.u32.u64.compose %v212, %v211
    %v214 = vextract.low.u32 %v213
    %v215 = vextract.high.u32 %v213
    %v216 = vmul.u32.u64.compose %v212, %v207
    %v217 = vextract.low.u32 %v216
    %v218 = vextract.high.u32 %v216
    %v219 = vmul.u32 %v212, %v203
    %v220 = vadd.s32 %v215, %v217
    %vm221 = vc.u32 %v215, %v217
    %v222 = vadd.s32 %v218, 1
    %v223 = vsel %vm221, %v222, %v218
    %v224 = vadd.s32 %v219, %v223
    %v225 = vadd.s32 %v224, 536870912
    %v226 = vshrl.u32 %v225, 30
    %v227 = vshll.u32 %v226, 30
    %v228 = vsub.s32 %v224, %v227
    %vm229 = vcmp.lt.s32.totalorder %v228, 0
    %v230 = vsub.s32 0, %v228
    %v231 = vsel %vm229, %v230, %v228
    %v232 = vclz %v231
    %v233 = vsub.s32 %v232, 2
    %vm234 = vcmp.gt.s32.totalorder 0, %v233
    %v235 = vsel %vm234, 0, %v233
    %v236 = vsub.s32 32, %v235
    %v237 = vshll.u32 %v228, %v235
    %v238 = vshrl.u32 %v220, %v236
    %v239 = vor.u32 %v237, %v238
    %v240 = vsub.s32 4294967266, %v235
    %v241 = vadd.s32 %v240, 127
    %v242 = vshll.u32 %v241, 23
    %v243 = vor.u32 4788187, %v242
    %v244 = vand.u32 2147483647, %v243
    %v246 = vcvt.s32.f32 %v239
    %v247 = vmul.f32 %v246, %v244
    %v248 = vxor.u32 %v247, 2147483648
    %v249 = vsel %vm166, %v248, %v247
    %v250 = vsub.s32 4, %v226
    %v251 = vsel %vm166, %v250, %v226
    %v252 = vsel %vm165, %v57, %v249
    %v253 = vsel %vm165, 0, %v251
    %v254 = vcosq.f32.pop %v252
    %v255 = vsinq.f32.pop %v252
    %vm256 = vweird.f32 %v57
    %v257 = vadd.s32 %v253, 3
    %v258 = vand.u32 %v257, 3
    %vm259 = vcmp.lt.s32.totalorder %v258, 2
    %vm260 = vcmp.eq.s32.totalorder %v258, 0
    %v261 = vxor.u32 %v255, 2147483648
    %v262 = vsel %vm260, %v254, %v261
    %vm263 = vcmp.eq.s32.totalorder %v258, 2
    %v264 = vxor.u32 %v254, 2147483648
    %v265 = vsel %vm263, %v264, %v255
    %v266 = vsel %vm259, %v262, %v265
    %v267 = vsel %vm256, nan, %v266
    %v268 = vand.u32 2147483647, %v58
    %vm269 = vcmp.le.f32.partialorder %v268, 0.7853982
    %vm270 = vcmp.lt.s32.totalorder %v58, 0
    %v271 = vand.u32 %v58, 2139095040
    %v272 = vshrl.u32 %v271, 23
    %v273 = vsub.s32 %v272, 127
    %v274 = vand.u32 2147483647, %v58
    %v275 = vand.u32 %v274, 8388607
    %v276 = vor.u32 %v275, 8388608
    %v277 = vsub.s32 0, %v276
    %v278 = vadd.s32 %v273, 1
    %vm279 = vcmp.gt.s32.totalorder %v278, 0
    %v280 = vsel %vm279, %v278, 0
    %v281 = vshrl.u32 %v280, 5
    %v282 = vand.u32 %v280, 31
    %v283 = vsub.s32 32, %v282
    %v284 = vshrl.u32 683565275, %v283
    %v285 = vshll.u32 683565275, %v282
    %v286 = vshrl.u32 2475754826, %v283
    %v287 = vor.u32 %v285, %v286
    %v288 = vshll.u32 2475754826, %v282
    %v289 = vshrl.u32 2131351028, %v283
    %v290 = vor.u32 %v288, %v289
    %v291 = vshll.u32 2131351028, %v282
    %v292 = vshrl.u32 2102212464, %v283
    %v293 = vor.u32 %v291, %v292
    %v294 = vshll.u32 2102212464, %v282
    %v295 = vshrl.u32 920167782, %v283
    %v296 = vor.u32 %v294, %v295
    %v297 = vshll.u32 920167782, %v282
    %v298 = vshrl.u32 1326507024, %v283
    %v299 = vor.u32 %v297, %v298
    %vm300 = vcmp.lt.s32.totalorder %v281, 1
    %vm301 = vcmp.lt.s32.totalorder %v281, 2
    %vm302 = vcmp.lt.s32.totalorder %v281, 3
    %vm303 = vcmp.lt.s32.totalorder %v281, 4
    %v304 = vsel %vm300, %v284, %v287
    %v305 = vsel %vm303, %v293, 2102212464
    %v306 = vsel %vm302, %v290, %v305
    %v307 = vsel %vm301, %v304, %v306
    %v308 = vsel %vm300, %v287, %v290
    %v309 = vsel %vm303, %v296, 920167782
    %v310 = vsel %vm302, %v293, %v309
    %v311 = vsel %vm301, %v308, %v310
    %v312 = vsel %vm300, %v290, %v293
    %v313 = vsel %vm303, %v299, 1326507024
    %v314 = vsel %vm302, %v296, %v313
    %v315 = vsel %vm301, %v312, %v314
    %v316 = vshll.u32 %v276, 8
    %v317 = vmul.u32.u64.compose %v316, %v315
    %v318 = vextract.low.u32 %v317
    %v319 = vextract.high.u32 %v317
    %v320 = vmul.u32.u64.compose %v316, %v311
    %v321 = vextract.low.u32 %v320
    %v322 = vextract.high.u32 %v320
    %v323 = vmul.u32 %v316, %v307
    %v324 = vadd.s32 %v319, %v321
    %vm325 = vc.u32 %v319, %v321
    %v326 = vadd.s32 %v322, 1
    %v327 = vsel %vm325, %v326, %v322
    %v328 = vadd.s32 %v323, %v327
    %v329 = vadd.s32 %v328, 536870912
    %v330 = vshrl.u32 %v329, 30
    %v331 = vshll.u32 %v330, 30
    %v332 = vsub.s32 %v328, %v331
    %vm333 = vcmp.lt.s32.totalorder %v332, 0
    %v334 = vsub.s32 0, %v332
    %v335 = vsel %vm333, %v334, %v332
    %v336 = vclz %v335
    %v337 = vsub.s32 %v336, 2
    %vm338 = vcmp.gt.s32.totalorder 0, %v337
    %v339 = vsel %vm338, 0, %v337
    %v340 = vsub.s32 32, %v339
    %v341 = vshll.u32 %v332, %v339
    %v342 = vshrl.u32 %v324, %v340
    %v343 = vor.u32 %v341, %v342
    %v344 = vsub.s32 4294967266, %v339
    %v345 = vadd.s32 %v344, 127
    %v346 = vshll.u32 %v345, 23
    %v347 = vor.u32 4788187, %v346
    %v348 = vand.u32 2147483647, %v347
    %v350 = vcvt.s32.f32 %v343
    %v351 = vmul.f32 %v350, %v348
    %v352 = vxor.u32 %v351, 2147483648
    %v353 = vsel %vm270, %v352, %v351
    %v354 = vsub.s32 4, %v330
    %v355 = vsel %vm270, %v354, %v330
    %v356 = vsel %vm269, %v58, %v353
    %v357 = vsel %vm269, 0, %v355
    %v358 = vcosq.f32.pop %v356
    %v359 = vsinq.f32.pop %v356
    %vm360 = vweird.f32 %v58
    %v361 = vadd.s32 %v357, 3
    %v362 = vand.u32 %v361, 3
    %vm363 = vcmp.lt.s32.totalorder %v362, 2
    %vm364 = vcmp.eq.s32.totalorder %v362, 0
    %v365 = vxor.u32 %v359, 2147483648
    %v366 = vsel %vm364, %v358, %v365
    %vm367 = vcmp.eq.s32.totalorder %v362, 2
    %v368 = vxor.u32 %v358, 2147483648
    %v369 = vsel %vm367, %v368, %v359
    %v370 = vsel %vm363, %v366, %v369
    %v371 = vsel %vm360, nan, %v370
    %v372 = vand.u32 2147483647, %v59
    %vm373 = vcmp.le.f32.partialorder %v372, 0.7853982
    %vm374 = vcmp.lt.s32.totalorder %v59, 0
    %v375 = vand.u32 %v59, 2139095040
    %v376 = vshrl.u32 %v375, 23
    %v377 = vsub.s32 %v376, 127
    %v378 = vand.u32 2147483647, %v59
    %v379 = vand.u32 %v378, 8388607
    %v380 = vor.u32 %v379, 8388608
    %v381 = vsub.s32 0, %v380
    %v382 = vadd.s32 %v377, 1
    %vm383 = vcmp.gt.s32.totalorder %v382, 0
    %v384 = vsel %vm383, %v382, 0
    %v385 = vshrl.u32 %v384, 5
    %v386 = vand.u32 %v384, 31
    %v387 = vsub.s32 32, %v386
    %v388 = vshrl.u32 683565275, %v387
    %v389 = vshll.u32 683565275, %v386
    %v390 = vshrl.u32 2475754826, %v387
    %v391 = vor.u32 %v389, %v390
    %v392 = vshll.u32 2475754826, %v386
    %v393 = vshrl.u32 2131351028, %v387
    %v394 = vor.u32 %v392, %v393
    %v395 = vshll.u32 2131351028, %v386
    %v396 = vshrl.u32 2102212464, %v387
    %v397 = vor.u32 %v395, %v396
    %v398 = vshll.u32 2102212464, %v386
    %v399 = vshrl.u32 920167782, %v387
    %v400 = vor.u32 %v398, %v399
    %v401 = vshll.u32 920167782, %v386
    %v402 = vshrl.u32 1326507024, %v387
    %v403 = vor.u32 %v401, %v402
    %vm404 = vcmp.lt.s32.totalorder %v385, 1
    %vm405 = vcmp.lt.s32.totalorder %v385, 2
    %vm406 = vcmp.lt.s32.totalorder %v385, 3
    %vm407 = vcmp.lt.s32.totalorder %v385, 4
    %v408 = vsel %vm404, %v388, %v391
    %v409 = vsel %vm407, %v397, 2102212464
    %v410 = vsel %vm406, %v394, %v409
    %v411 = vsel %vm405, %v408, %v410
    %v412 = vsel %vm404, %v391, %v394
    %v413 = vsel %vm407, %v400, 920167782
    %v414 = vsel %vm406, %v397, %v413
    %v415 = vsel %vm405, %v412, %v414
    %v416 = vsel %vm404, %v394, %v397
    %v417 = vsel %vm407, %v403, 1326507024
    %v418 = vsel %vm406, %v400, %v417
    %v419 = vsel %vm405, %v416, %v418
    %v420 = vshll.u32 %v380, 8
    %v421 = vmul.u32.u64.compose %v420, %v419
    %v422 = vextract.low.u32 %v421
    %v423 = vextract.high.u32 %v421
    %v424 = vmul.u32.u64.compose %v420, %v415
    %v425 = vextract.low.u32 %v424
    %v426 = vextract.high.u32 %v424
    %v427 = vmul.u32 %v420, %v411
    %v428 = vadd.s32 %v423, %v425
    %vm429 = vc.u32 %v423, %v425
    %v430 = vadd.s32 %v426, 1
    %v431 = vsel %vm429, %v430, %v426
    %v432 = vadd.s32 %v427, %v431
    %v433 = vadd.s32 %v432, 536870912
    %v434 = vshrl.u32 %v433, 30
    %v435 = vshll.u32 %v434, 30
    %v436 = vsub.s32 %v432, %v435
    %vm437 = vcmp.lt.s32.totalorder %v436, 0
    %v438 = vsub.s32 0, %v436
    %v439 = vsel %vm437, %v438, %v436
    %v440 = vclz %v439
    %v441 = vsub.s32 %v440, 2
    %vm442 = vcmp.gt.s32.totalorder 0, %v441
    %v443 = vsel %vm442, 0, %v441
    %v444 = vsub.s32 32, %v443
    %v445 = vshll.u32 %v436, %v443
    %v446 = vshrl.u32 %v428, %v444
    %v447 = vor.u32 %v445, %v446
    %v448 = vsub.s32 4294967266, %v443
    %v449 = vadd.s32 %v448, 127
    %v450 = vshll.u32 %v449, 23
    %v451 = vor.u32 4788187, %v450
    %v452 = vand.u32 2147483647, %v451
    %v454 = vcvt.s32.f32 %v447
    %v455 = vmul.f32 %v454, %v452
    %v456 = vxor.u32 %v455, 2147483648
    %v457 = vsel %vm374, %v456, %v455
    %v458 = vsub.s32 4, %v434
    %v459 = vsel %vm374, %v458, %v434
    %v460 = vsel %vm373, %v59, %v457
    %v461 = vsel %vm373, 0, %v459
    %v462 = vcosq.f32.pop %v460
    %v463 = vsinq.f32.pop %v460
    %vm464 = vweird.f32 %v59
    %v465 = vadd.s32 %v461, 3
    %v466 = vand.u32 %v465, 3
    %vm467 = vcmp.lt.s32.totalorder %v466, 2
    %vm468 = vcmp.eq.s32.totalorder %v466, 0
    %v469 = vxor.u32 %v463, 2147483648
    %v470 = vsel %vm468, %v462, %v469
    %vm471 = vcmp.eq.s32.totalorder %v466, 2
    %v472 = vxor.u32 %v462, 2147483648
    %v473 = vsel %vm471, %v472, %v463
    %v474 = vsel %vm467, %v470, %v473
    %v475 = vsel %vm464, nan, %v474
    %v476 = vld [vmem:[#allocation2] sm:$0xff]
    %v477 = vld [vmem:[#allocation2 + $0x8] sm:$0xff]
    %v478 = vld [vmem:[#allocation2 + $0x10] sm:$0xff]
    %v479 = vld [vmem:[#allocation2 + $0x18] sm:$0xff]
    %v480 = vadd.f32 %v476, %v163
    %v481 = vadd.f32 %v477, %v267
    %v482 = vadd.f32 %v478, %v371
    %v483 = vadd.f32 %v479, %v475
    %vm484 = vcmask 523264
    %485 = vst.msk [vmem:[#allocation5] sm:$0xff] %vm484, %v480
    %486 = vst.msk [vmem:[#allocation5 + $0x8] sm:$0xff] %vm484, %v481
    %487 = vst.msk [vmem:[#allocation5 + $0x10] sm:$0xff] %vm484, %v482
    %488 = vst.msk [vmem:[#allocation5 + $0x18] sm:$0xff] %vm484, %v483
    // Predicated region
    $region10: #{tpu_custom_call.1} parent=1 // pred_check
      _
    $region11: #{tpu_custom_call.1} parent=1 // pred_check_branch
      %490 = sbr.rel (0) target = $region13
    $region12: #{tpu_custom_call.1} parent=1 // pred_region
      %s492 = ssub.s32 512, 512
      %493 = vsyncadd [#allocation4], %s492
      %s494 = sshll.u32 [#allocation5], 4
      %s495 = int_to_ptr.vmem [resolvable:$true] %s494
      %500 = dma.vmem_to_hbm [thread:$0]  %s495, 512, %s1, [#allocation4], 128, 128, 8
    $region13: #{tpu_custom_call.1} parent=1 // pred_fallthru
      _
    // Predicated region
    $region14: #{tpu_custom_call.1} parent=1 // pred_check
      _
    $region15: #{tpu_custom_call.1} parent=1 // pred_check_branch
      %502 = sbr.rel (0) target = $region17
    $region16: #{tpu_custom_call.1} parent=1 // pred_region
      %503 = dma.done [#allocation4], 512
    $region17: #{tpu_custom_call.1} parent=1 // pred_fallthru
      _
    %504 = vsyncpa [#allocation3], 1
    %505 = vsyncpa [#allocation4], 1

</llo_original>
